<compile_context>
chip_gen: v7x
topology: tpu7x:2x2x1
jax: 0.10.0
libtpu: 0.0.40
codegen_flags: <defaults>
</compile_context>

<pallas_src>
import math

import jax
import jax.numpy as jnp
from jax.experimental import pallas as pl


def policy_net_kernel(idx_ref, wf_ref, bf_ref, out_ref):
    """One grid step: whole (padded) batch of state indices -> action probabilities.

    idx_ref : VMEM (b_pad, 1) int32          -- clamped state indices
    wf_ref  : VMEM (pad_in, pad_out) f32     -- fused W1^T @ W2^T, zero-padded
    bf_ref  : VMEM (1, pad_out) f32          -- fused bias, padded cols = -1e30
    out_ref : VMEM (b_pad, pad_out) f32      -- softmax probs (real cols first)
    """
    b_pad = out_ref.shape[0]
    pad_in = wf_ref.shape[0]

    # Vectorized one-hot: (b_pad, pad_in). Exact 0/1 -> MXU matmul is exact row select.
    col = jax.lax.broadcasted_iota(jnp.int32, (b_pad, pad_in), 1)
    onehot = (col == idx_ref[...]).astype(jnp.float32)

    logits = jnp.dot(onehot, wf_ref[...], preferred_element_type=jnp.float32) + bf_ref[...]

    # Row-wise softmax (== PyTorch softmax(dim=0) of each 1-D output vector).
    m = jnp.max(logits, axis=-1, keepdims=True)
    e = jnp.exp(logits - m)                       # padded cols: exp(-1e30 - m) == 0
    out_ref[...] = e / jnp.sum(e, axis=-1, keepdims=True)   # exact division: rows sum to 1


def prepare_params(w1, b1, w2, b2):
    """One-time preprocessing: fuse the two activation-free Linears and pad lane-dense.

    w1: (hidden, input_size)  b1: (hidden,)   -- fc1 (PyTorch layout)
    w2: (output, hidden)      b2: (output,)   -- fc2
    Returns (wf_padded, bf_padded, input_size, output_size).
    """
    w1 = jnp.asarray(w1, jnp.float32)
    b1 = jnp.asarray(b1, jnp.float32)
    w2 = jnp.asarray(w2, jnp.float32)
    b2 = jnp.asarray(b2, jnp.float32)

    hi = jax.lax.Precision.HIGHEST
    wf = jnp.dot(w1.T, w2.T, precision=hi)        # (input_size, output_size)
    bf = jnp.dot(b1, w2.T, precision=hi) + b2     # (output_size,)

    input_size, output_size = wf.shape
    pad_in = 128 * int(pl.cdiv(input_size, 128))
    pad_out = 128 * int(pl.cdiv(output_size, 128))

    wf_p = jnp.zeros((pad_in, pad_out), jnp.float32).at[:input_size, :output_size].set(wf)
    bf_p = jnp.full((1, pad_out), -1e30, jnp.float32).at[0, :output_size].set(bf)
    return (wf_p, bf_p, input_size, output_size)


@jax.jit
def _forward_padded(idx2d, wf_p, bf_p):
    """Jitted pallas_call on a statically padded batch (compiled once per bucket)."""
    b_pad = idx2d.shape[0]
    pad_in, pad_out = wf_p.shape
    return pl.pallas_call(
        policy_net_kernel,
        out_shape=jax.ShapeDtypeStruct((b_pad, pad_out), jnp.float32),
        grid=(1,),  # whole batch in a single step; tiny working set (<70 KB) fits any VMEM
        in_specs=[
            pl.BlockSpec((b_pad, 1), lambda i: (0, 0)),
            pl.BlockSpec((pad_in, pad_out), lambda i: (0, 0)),
            pl.BlockSpec((1, pad_out), lambda i: (0, 0)),
        ],
        out_specs=pl.BlockSpec((b_pad, pad_out), lambda i: (0, 0)),
    )(idx2d, wf_p, bf_p)
    # TODO(synk): for many-thousand-row batches, tile the batch axis and use
    # pltpu.CORE_PARALLEL to engage both v7x TensorCores; unnecessary for RL rollouts.


def policy_net_forward_batched(state_indices, params):
    """Batched forward: (B,) int state indices -> (B, output_size) action probabilities."""
    wf_p, bf_p, input_size, output_size = params

    idx = jnp.asarray(state_indices, jnp.int32).reshape(-1)
    b = idx.shape[0]
    # Static power-of-two bucket (>= 8): reuses the compiled kernel across rollout lengths.
    b_pad = max(8, int(pl.next_power_of_2(b)))

    idx = jnp.clip(idx, 0, input_size - 1)        # clamp hoisted out of the kernel
    if b_pad != b:
        idx = jnp.pad(idx, (0, b_pad - b))        # padded rows use index 0, sliced off below

    out = _forward_padded(idx.reshape(b_pad, 1), wf_p, bf_p)
    return out[:b, :output_size]


def policy_net_forward(state_idx, params):
    """PyTorch forward() semantics: single int state -> (output_size,) probabilities."""
    probs = policy_net_forward_batched(jnp.asarray([state_idx], jnp.int32), params)
    return probs[0]


def _torch_like_linear_init(key, out_features, in_features):
    """Deterministic init mimicking torch.nn.Linear default (uniform +-1/sqrt(fan_in))."""
    kw, kb = jax.random.split(key)
    bound = 1.0 / math.sqrt(in_features)
    w = jax.random.uniform(kw, (out_features, in_features), jnp.float32, -bound, bound)
    b = jax.random.uniform(kb, (out_features,), jnp.float32, -bound, bound)
    return w, b


if __name__ == "__main__":
    # Cliff-walking-style sizes: 4x12 grid -> 48 states, 4 actions.
    input_size = 48
    hidden_layer_size = 64
    output_size = 4

    key = jax.random.PRNGKey(0)
    k1, k2, k3 = jax.random.split(key, 3)
    w1, b1 = _torch_like_linear_init(k1, hidden_layer_size, input_size)   # fc1
    w2, b2 = _torch_like_linear_init(k2, output_size, hidden_layer_size)  # fc2

    params = prepare_params(w1, b1, w2, b2)   # one-time fuse + pad (hoisted)

    # Batched path: a rollout's worth of states in one pallas_call (21 -> bucket 32).
    states = jax.random.randint(k3, (21,), 0, input_size, dtype=jnp.int32)
    probs_b = jax.block_until_ready(policy_net_forward_batched(states, params))

    # Single-state path (original module's forward(x: int)).
    state_idx = 17
    probs_1 = jax.block_until_ready(policy_net_forward(state_idx, params))

    # Pure-JAX reference of the same math (unfused, high precision).
    def ref_forward(i):
        onehot = jax.nn.one_hot(i, input_size, dtype=jnp.float32)
        hi = jax.lax.Precision.HIGHEST
        h = jnp.dot(onehot, jnp.asarray(w1).T, precision=hi) + b1
        logits = jnp.dot(h, jnp.asarray(w2).T, precision=hi) + b2
        return jax.nn.softmax(logits, axis=-1)

    ref_b = jax.vmap(ref_forward)(states)
    ref_1 = ref_forward(jnp.int32(state_idx))

    assert probs_b.shape == (states.shape[0], output_size)
    assert probs_1.shape == (output_size,)
    assert bool(jnp.allclose(jnp.sum(probs_b, axis=-1), 1.0, atol=1e-5))
    assert bool(jnp.allclose(probs_b, ref_b, atol=1e-4))
    assert bool(jnp.allclose(probs_1, ref_1, atol=1e-4))

    # TODO(synk): get_action_and_logp/act (Categorical sampling) stay host-side; only forward() is a kernel.
    print("KERNEL_OK")
</pallas_src>

<mosaic_0001>
module attributes {stable_mosaic.version = 11 : i64} {
  func.func @policy_net_kernel(%arg0: i32, %arg1: memref<32x1xi32, #tpu.memory_space<vmem>>, %arg2: memref<128x128xf32, #tpu.memory_space<vmem>>, %arg3: memref<1x128xf32, #tpu.memory_space<vmem>>, %arg4: memref<32x128xf32, #tpu.memory_space<vmem>>) attributes {dimension_semantics = [#tpu.dimension_semantics<arbitrary>], iteration_bounds = array<i64: 1>, scalar_prefetch = 0 : i64, scratch_operands = 0 : i64, tpu.core_type = #tpu.core_type<tc>, window_params = [{pipeline_mode = #tpu.pipeline_mode<synchronous>, transform_indices = @transform_0, window_bounds = array<i64: 32, 1>}, {pipeline_mode = #tpu.pipeline_mode<synchronous>, transform_indices = @transform_1, window_bounds = array<i64: 128, 128>}, {pipeline_mode = #tpu.pipeline_mode<synchronous>, transform_indices = @transform_2, window_bounds = array<i64: 1, 128>}, {pipeline_mode = #tpu.pipeline_mode<synchronous>, transform_indices = @transform_3, window_bounds = array<i64: 32, 128>}]} {
    %0 = tpu.iota {dimensions = array<i32: 1>} : vector<32x128xi32>
    %c0 = arith.constant 0 : index
    %c0_0 = arith.constant 0 : index
    %1 = vector.load %arg1[%c0, %c0_0] : memref<32x1xi32, #tpu.memory_space<vmem>>, vector<32x1xi32>
    %2 = vector.broadcast %1 : vector<32x1xi32> to vector<32x128xi32>
    %3 = arith.cmpi eq, %0, %2 : vector<32x128xi32>
    %4 = arith.extui %3 : vector<32x128xi1> to vector<32x128xi32>
    %5 = arith.sitofp %4 : vector<32x128xi32> to vector<32x128xf32>
    %c0_1 = arith.constant 0 : index
    %c0_2 = arith.constant 0 : index
    %6 = vector.load %arg2[%c0_1, %c0_2] : memref<128x128xf32, #tpu.memory_space<vmem>>, vector<128x128xf32>
    %cst = arith.constant dense<0.000000e+00> : vector<32x128xf32>
    %7 = tpu.matmul %5, %6, %cst {dimension_numbers = #tpu.dot_dimension_numbers<[1], [0], [0], [1], [0, 0, 1, 1], [], []>} : vector<32x128xf32>, vector<128x128xf32>, vector<32x128xf32> -> vector<32x128xf32>
    %c0_3 = arith.constant 0 : index
    %c0_4 = arith.constant 0 : index
    %8 = vector.load %arg3[%c0_3, %c0_4] : memref<1x128xf32, #tpu.memory_space<vmem>>, vector<1x128xf32>
    %9 = vector.broadcast %8 : vector<1x128xf32> to vector<32x128xf32>
    %10 = arith.addf %7, %9 : vector<32x128xf32>
    %cst_5 = arith.constant dense<0xFF800000> : vector<32xf32>
    %11 = vector.multi_reduction <maximumf>, %10, %cst_5 [1] : vector<32x128xf32> to vector<32xf32>
    %12 = vector.shape_cast %11 : vector<32xf32> to vector<32x1xf32>
    %13 = vector.broadcast %12 : vector<32x1xf32> to vector<32x128xf32>
    %14 = arith.subf %10, %13 : vector<32x128xf32>
    %15 = math.exp %14 : vector<32x128xf32>
    %cst_6 = arith.constant dense<0.000000e+00> : vector<32xf32>
    %16 = vector.multi_reduction <add>, %15, %cst_6 [1] : vector<32x128xf32> to vector<32xf32>
    %17 = vector.shape_cast %16 : vector<32xf32> to vector<32x1xf32>
    %18 = vector.broadcast %17 : vector<32x1xf32> to vector<32x128xf32>
    %19 = arith.divf %15, %18 : vector<32x128xf32>
    %c0_7 = arith.constant 0 : index
    %c0_8 = arith.constant 0 : index
    %20 = vector.load %arg4[%c0_7, %c0_8] : memref<32x128xf32, #tpu.memory_space<vmem>>, vector<32x128xf32>
    tpu.vector_store %arg4[%c0_7, %c0_8], %19 {strides = array<i32>} : memref<32x128xf32, #tpu.memory_space<vmem>>, vector<32x128xf32>,
    return
  }
  func.func @transform_0(%arg0: i32) -> (i32, i32) {
    %c0_i32 = arith.constant 0 : i32
    %c0_i32_0 = arith.constant 0 : i32
    %c0_i32_1 = arith.constant 0 : i32
    return %c0_i32, %c0_i32_0 : i32, i32
  }
  func.func @transform_1(%arg0: i32) -> (i32, i32) {
    %c0_i32 = arith.constant 0 : i32
    %c0_i32_0 = arith.constant 0 : i32
    %c0_i32_1 = arith.constant 0 : i32
    return %c0_i32, %c0_i32_0 : i32, i32
  }
  func.func @transform_2(%arg0: i32) -> (i32, i32) {
    %c0_i32 = arith.constant 0 : i32
    %c0_i32_0 = arith.constant 0 : i32
    %c0_i32_1 = arith.constant 0 : i32
    return %c0_i32, %c0_i32_0 : i32, i32
  }
  func.func @transform_3(%arg0: i32) -> (i32, i32) {
    %c0_i32 = arith.constant 0 : i32
    %c0_i32_0 = arith.constant 0 : i32
    %c0_i32_1 = arith.constant 0 : i32
    return %c0_i32, %c0_i32_0 : i32, i32
  }
}

</mosaic_0001>

<llo_original>
// kernel: _forward_padded.1
$region0: #{_forward_padded.1}
  #allocation0 [shape = 'u32[]', space=smem, size = 0x4, offset = 0x4, fixed_abs, tag = 'smem constant byte address 0x4 - core index']
  #allocation1 [shape = 'u32[144,128]{1,0:T(1,128)}', space=vmem, size = 0x12000, scoped, tag = 'internal scratch']
  %s0 = inlined_call_operand.vmem [shape: s32[32,1], index: 0, kind: input, shape index: {}]
  %s1 = inlined_call_operand.hbm [shape: f32[128,128], index: 1, kind: input, shape index: {}]
  %s2 = inlined_call_operand.vmem [shape: f32[1,128], index: 2, kind: input, shape index: {}]
  %s3 = inlined_call_operand.hbm [shape: f32[32,128], index: 3, kind: output, shape index: {}]
  %s4 = sld [smem:[#allocation0]]
  $region26: #{_forward_padded.1} parent=0
    _
  %s6 = ssub.s32 1, %s4
  %s7 = scalar_select 0, %s6, %s4
  $region1: #{_forward_padded.1} parent=0
    #allocation2 [shape = 'u8[65536]{0}', space=vmem, size = 0x10000, scoped, tag = 'input window, operand 1, single buffered']
    #allocation3 [shape = 's32[1]{0}', space=sflag, size = 0x4, scoped, tag = 'scoped memory for _forward_padded.1']
    #allocation4 [shape = 's32[1]{0}', space=sflag, size = 0x4, scoped, tag = 'scoped memory for _forward_padded.1']
    #allocation5 [shape = 'u8[16384]{0}', space=vmem, size = 0x4000, scoped, tag = 'output window, operand 0, single buffered']
    %8 = vsyncpa [#allocation3], 0
    %9 = vsyncpa [#allocation4], 0
    // Predicated region
    $region2: #{_forward_padded.1} parent=1 // pred_check
      _
    $region3: #{_forward_padded.1} parent=1 // pred_check_branch
      %11 = sbr.rel (0) target = $region5
    $region4: #{_forward_padded.1} parent=1 // pred_region
      _
    $region5: #{_forward_padded.1} parent=1 // pred_fallthru
      _
    // Predicated region
    $region6: #{_forward_padded.1} parent=1 // pred_check
      _
    $region7: #{_forward_padded.1} parent=1 // pred_check_branch
      %13 = sbr.rel (0) target = $region9
    $region8: #{_forward_padded.1} parent=1 // pred_region
      %s15 = ssub.s32 2048, 2048
      %16 = vsyncadd [#allocation3], %s15
      %s17 = sshll.u32 [#allocation2], 4
      %s18 = int_to_ptr.vmem [resolvable:$true] %s17
      %23 = dma.hbm_to_vmem [thread:$0]  %s1, 2048, %s18, [#allocation3], 128, 128, 8
    $region9: #{_forward_padded.1} parent=1 // pred_fallthru
      _
    // Predicated region
    $region10: #{_forward_padded.1} parent=1 // pred_check
      _
    $region11: #{_forward_padded.1} parent=1 // pred_check_branch
      %25 = sbr.rel (0) target = $region13
    $region12: #{_forward_padded.1} parent=1 // pred_region
      _
    $region13: #{_forward_padded.1} parent=1 // pred_fallthru
      _
    // Predicated region
    $region14: #{_forward_padded.1} parent=1 // pred_check
      _
    $region15: #{_forward_padded.1} parent=1 // pred_check_branch
      %27 = sbr.rel (0) target = $region17
    $region16: #{_forward_padded.1} parent=1 // pred_region
      %28 = dma.done [#allocation3], 2048
    $region17: #{_forward_padded.1} parent=1 // pred_fallthru
      _
    %v29 = vlaneseq
    %v30 = vand.u32 %v29, 127
    %v31 = vld [vmem:[%s0] sm:$0xff]
    %v32 = vld [vmem:[%s0 + $0x8] sm:$0xff]
    %v33 = vld [vmem:[%s0 + $0x10] sm:$0xff]
    %v34 = vld [vmem:[%s0 + $0x18] sm:$0xff]
    %35 = vset.pattern.permute.xlu0 0
    %36 = vperm.xlu0 %35, %v31
    %v37 = vpop.permute.xlu0 %36
    %38 = vset.pattern.permute.xlu0 0
    %39 = vperm.xlu0 %38, %v32
    %v40 = vpop.permute.xlu0 %39
    %41 = vset.pattern.permute.xlu0 0
    %42 = vperm.xlu0 %41, %v33
    %v43 = vpop.permute.xlu0 %42
    %44 = vset.pattern.permute.xlu0 0
    %45 = vperm.xlu0 %44, %v34
    %v46 = vpop.permute.xlu0 %45
    %vm47 = vcmp.eq.s32.totalorder %v30, %v37
    %vm48 = vcmp.eq.s32.totalorder %v30, %v40
    %vm49 = vcmp.eq.s32.totalorder %v30, %v43
    %vm50 = vcmp.eq.s32.totalorder %v30, %v46
    %v51 = vsel %vm47, 1, 0
    %v52 = vsel %vm48, 1, 0
    %v53 = vsel %vm49, 1, 0
    %v54 = vsel %vm50, 1, 0
    %v55 = vcvt.s32.f32 %v51
    %v56 = vcvt.s32.f32 %v52
    %v57 = vcvt.s32.f32 %v53
    %v58 = vcvt.s32.f32 %v54
    %v59 = vld [vmem:[#allocation2] sm:$0xff]
    %v60 = vld [vmem:[#allocation2 + $0x8] sm:$0xff]
    %v61 = vld [vmem:[#allocation2 + $0x10] sm:$0xff]
    %v62 = vld [vmem:[#allocation2 + $0x18] sm:$0xff]
    %v63 = vld [vmem:[#allocation2 + $0x20] sm:$0xff]
    %v64 = vld [vmem:[#allocation2 + $0x28] sm:$0xff]
    %v65 = vld [vmem:[#allocation2 + $0x30] sm:$0xff]
    %v66 = vld [vmem:[#allocation2 + $0x38] sm:$0xff]
    %v67 = vld [vmem:[#allocation2 + $0x40] sm:$0xff]
    %v68 = vld [vmem:[#allocation2 + $0x48] sm:$0xff]
    %v69 = vld [vmem:[#allocation2 + $0x50] sm:$0xff]
    %v70 = vld [vmem:[#allocation2 + $0x58] sm:$0xff]
    %v71 = vld [vmem:[#allocation2 + $0x60] sm:$0xff]
    %v72 = vld [vmem:[#allocation2 + $0x68] sm:$0xff]
    %v73 = vld [vmem:[#allocation2 + $0x70] sm:$0xff]
    %v74 = vld [vmem:[#allocation2 + $0x78] sm:$0xff]
    %v75 = vld [vmem:[%s2] sm:$0x1]
    %v77 = vlaneseq
    %v78 = vshrl.u32 %v77, 7
    %v79 = vsub.s32 0, %v78
    %v80 = vrot.slane %v75, %v79
    %82 = vmatprep.subr.mxu0 0.0
    %83 = vmatpush1.msra.mxu0 %v59
    %84 = vmatprep.subr.mxu0 0.0
    %85 = vmatpush1.msra.mxu0 %v60
    %86 = vmatprep.subr.mxu0 0.0
    %87 = vmatpush1.msra.mxu0 %v61
    %88 = vmatprep.subr.mxu0 0.0
    %89 = vmatpush1.msra.mxu0 %v62
    %90 = vmatprep.subr.mxu0 0.0
    %91 = vmatpush1.msra.mxu0 %v63
    %92 = vmatprep.subr.mxu0 0.0
    %93 = vmatpush1.msra.mxu0 %v64
    %94 = vmatprep.subr.mxu0 0.0
    %95 = vmatpush1.msra.mxu0 %v65
    %96 = vmatprep.subr.mxu0 0.0
    %97 = vmatpush1.msra.mxu0 %v66
    %98 = vmatprep.subr.mxu0 0.0
    %99 = vmatpush1.msra.mxu0 %v67
    %100 = vmatprep.subr.mxu0 0.0
    %101 = vmatpush1.msra.mxu0 %v68
    %102 = vmatprep.subr.mxu0 0.0
    %103 = vmatpush1.msra.mxu0 %v69
    %104 = vmatprep.subr.mxu0 0.0
    %105 = vmatpush1.msra.mxu0 %v70
    %106 = vmatprep.subr.mxu0 0.0
    %107 = vmatpush1.msra.mxu0 %v71
    %108 = vmatprep.subr.mxu0 0.0
    %109 = vmatpush1.msra.mxu0 %v72
    %110 = vmatprep.subr.mxu0 0.0
    %111 = vmatpush1.msra.mxu0 %v73
    %112 = vmatprep.subr.mxu0 0.0
    %113 = vmatpush1.msra.mxu0 %v74
    %114 = vmatprep.subr.mxu0 0.0
    %115 = vmatpush1.msra.mxu0 0.0
    %116 = vmatprep.subr.mxu0 0.0
    %117 = vmatpush1.msra.mxu0 0.0
    %118 = vmatprep.subr.mxu0 0.0
    %119 = vmatpush1.msra.mxu0 0.0
    %120 = vmatprep.subr.mxu0 0.0
    %121 = vmatpush1.msra.mxu0 0.0
    %122 = vmatprep.subr.mxu0 0.0
    %123 = vmatpush1.msra.mxu0 0.0
    %124 = vmatprep.subr.mxu0 0.0
    %125 = vmatpush1.msra.mxu0 0.0
    %126 = vmatprep.subr.mxu0 0.0
    %127 = vmatpush1.msra.mxu0 0.0
    %128 = vmatprep.subr.mxu0 0.0
    %129 = vmatpush1.msra.mxu0 0.0
    %130 = vmatprep.subr.mxu0 0.0
    %131 = vmatpush1.msra.mxu0 0.0
    %132 = vmatprep.subr.mxu0 0.0
    %133 = vmatpush1.msra.mxu0 0.0
    %134 = vmatprep.subr.mxu0 0.0
    %135 = vmatpush1.msra.mxu0 0.0
    %136 = vmatprep.subr.mxu0 0.0
    %137 = vmatpush1.msra.mxu0 0.0
    %138 = vmatprep.subr.mxu0 0.0
    %139 = vmatpush1.msra.mxu0 0.0
    %140 = vmatprep.subr.mxu0 0.0
    %141 = vmatpush1.msra.mxu0 0.0
    %142 = vmatprep.subr.mxu0 0.0
    %143 = vmatpush1.msra.mxu0 0.0
    %144 = vmatprep.subr.mxu0 0.0
    %145 = vmatpush1.msra.mxu0 0.0
    %146 = vmatprep.mubr.f32.mxu0 0.0
    %147 = vmatmul.mubr.f32.gmra.mrb[0].mxu0 %v55
    %v148 = vpop.f32.mrb[0].mxu0
    %v149 = vadd.f32 %v80, %v148
    %v150 = vpop.f32.mrb[0].mxu0
    %151 = vmatprep.mubr.f32.mxu0 0.0
    %152 = vmatmul.mubr.f32.gmra.mrb[0].mxu0 %v56
    %v153 = vpop.f32.mrb[0].mxu0
    %v154 = vadd.f32 %v80, %v153
    %v155 = vpop.f32.mrb[0].mxu0
    %156 = vmatprep.mubr.f32.mxu0 0.0
    %157 = vmatmul.mubr.f32.gmra.mrb[0].mxu0 %v57
    %v158 = vpop.f32.mrb[0].mxu0
    %v159 = vadd.f32 %v80, %v158
    %v160 = vpop.f32.mrb[0].mxu0
    %161 = vmatprep.mubr.f32.mxu0 0.0
    %162 = vmatmul.mubr.f32.gmra.mrb[0].mxu0 %v58
    %v163 = vpop.f32.mrb[0].mxu0
    %v164 = vadd.f32 %v80, %v163
    %v165 = vpop.f32.mrb[0].mxu0
    %166 = vdwg.mxu0
    %167 = vmax.xlane.f32.xlu0 %v149
    %v168 = vpop.xlane.xlu0 %167
    %169 = vmax.xlane.f32.xlu0 %v154
    %v170 = vpop.xlane.xlu0 %169
    %171 = vmax.xlane.f32.xlu0 %v159
    %v172 = vpop.xlane.xlu0 %171
    %173 = vmax.xlane.f32.xlu0 %v164
    %v174 = vpop.xlane.xlu0 %173
    %v175 = vsub.f32 %v149, %v168
    %v176 = vsub.f32 %v154, %v170
    %v177 = vsub.f32 %v159, %v172
    %v178 = vsub.f32 %v164, %v174
    %v179 = vmul.f32 %v175, 1.442695
    %v180 = vpow.pop %v179
    %v181 = vmul.f32 %v176, 1.442695
    %v182 = vpow.pop %v181
    %v183 = vmul.f32 %v177, 1.442695
    %v184 = vpow.pop %v183
    %v185 = vmul.f32 %v178, 1.442695
    %v186 = vpow.pop %v185
    %187 = vadd.xlane.f32.xlu0 %v180
    %v188 = vpop.xlane.xlu0 %187
    %189 = vadd.xlane.f32.xlu0 %v182
    %v190 = vpop.xlane.xlu0 %189
    %191 = vadd.xlane.f32.xlu0 %v184
    %v192 = vpop.xlane.xlu0 %191
    %193 = vadd.xlane.f32.xlu0 %v186
    %v194 = vpop.xlane.xlu0 %193
    %v195 = vrcp.pop %v188
    %v196 = vmul.f32 %v180, %v195
    %v197 = vrcp.pop %v190
    %v198 = vmul.f32 %v182, %v197
    %v199 = vrcp.pop %v192
    %v200 = vmul.f32 %v184, %v199
    %v201 = vrcp.pop %v194
    %v202 = vmul.f32 %v186, %v201
    %203 = vst [vmem:[#allocation5] sm:$0xff] %v196
    %204 = vst [vmem:[#allocation5 + $0x8] sm:$0xff] %v198
    %205 = vst [vmem:[#allocation5 + $0x10] sm:$0xff] %v200
    %206 = vst [vmem:[#allocation5 + $0x18] sm:$0xff] %v202
    // Predicated region
    $region18: #{_forward_padded.1} parent=1 // pred_check
      _
    $region19: #{_forward_padded.1} parent=1 // pred_check_branch
      %208 = sbr.rel (0) target = $region21
    $region20: #{_forward_padded.1} parent=1 // pred_region
      %s210 = ssub.s32 512, 512
      %211 = vsyncadd [#allocation4], %s210
      %s212 = sshll.u32 [#allocation5], 4
      %s213 = int_to_ptr.vmem [resolvable:$true] %s212
      %218 = dma.vmem_to_hbm [thread:$0]  %s213, 512, %s3, [#allocation4], 128, 128, 8
    $region21: #{_forward_padded.1} parent=1 // pred_fallthru
      _
    // Predicated region
    $region22: #{_forward_padded.1} parent=1 // pred_check
      _
    $region23: #{_forward_padded.1} parent=1 // pred_check_branch
      %220 = sbr.rel (0) target = $region25
    $region24: #{_forward_padded.1} parent=1 // pred_region
      %221 = dma.done [#allocation4], 512
    $region25: #{_forward_padded.1} parent=1 // pred_fallthru
      _
    %222 = vsyncpa [#allocation3], 1
    %223 = vsyncpa [#allocation4], 1

</llo_original>
